<compile_context>
chip_gen: v6e
topology: v6e:2x2x1
jax: 0.10.0
libtpu: 0.0.40
codegen_flags: <defaults>
</compile_context>

<pallas_src>
import jax
import jax.numpy as jnp
from jax.experimental import pallas as pl
from jax.experimental.pallas import tpu as pltpu


# ---------------------------------------------------------------------------
# Kernel
# ---------------------------------------------------------------------------
def _scalar_multiply_kernel(alpha_ref, x_ref, o_ref):
    # alpha lives in SMEM as a (1,) float32 scalar; compute is pure VPU
    # elementwise. Multiply in f32, cast back to the output dtype.
    alpha = alpha_ref[0]
    o_ref[...] = (alpha * x_ref[...].astype(jnp.float32)).astype(o_ref.dtype)


# ---------------------------------------------------------------------------
# Tiling policy
# ---------------------------------------------------------------------------
_LANE_CANDIDATES = (8192, 4096, 2048, 1024, 512, 256, 128)  # wide -> narrow
_TARGET_BLOCK_BYTES = 2 * 1024 * 1024   # ~2 MiB blocks; 4x double-buffered fits v5e
_MIN_PALLAS_BYTES = 1 * 1024 * 1024     # below this, fused XLA alpha*x wins


def _sublane_multiple(dtype):
    itemsize = jnp.dtype(dtype).itemsize
    return {4: 8, 2: 16, 1: 32}.get(itemsize, 8)


def _scalar_multiply_2d(x2d, alpha_f32):
    rows, lanes = x2d.shape
    itemsize = jnp.dtype(x2d.dtype).itemsize
    sub = _sublane_multiple(x2d.dtype)

    # Pick the largest row tile (multiple of the sublane minimum) whose block
    # stays under the target byte budget; clamp to the full row extent.
    target_rows = max(sub, (_TARGET_BLOCK_BYTES // (lanes * itemsize)) // sub * sub)
    tile_rows = min(rows, target_rows)

    grid = (pl.cdiv(rows, tile_rows),)

    return pl.pallas_call(
        _scalar_multiply_kernel,
        out_shape=jax.ShapeDtypeStruct((rows, lanes), x2d.dtype),
        grid_spec=pltpu.PrefetchScalarGridSpec(
            num_scalar_prefetch=0,
            grid=grid,
            in_specs=[
                pl.BlockSpec(memory_space=pltpu.SMEM),                 # alpha (1,) f32
                pl.BlockSpec((tile_rows, lanes), lambda i: (i, 0)),    # x slab
            ],
            out_specs=pl.BlockSpec((tile_rows, lanes), lambda i: (i, 0)),
        ),
        compiler_params=pltpu.CompilerParams(
            dimension_semantics=("parallel",),
        ),
    )(alpha_f32, x2d)


# ---------------------------------------------------------------------------
# Module forward
# ---------------------------------------------------------------------------
def scalar_multiply_forward(x, alpha, *, force_pallas=False):
    """Pallas equivalent of ScalarMultiply(alpha).forward(x, _).

    Handles the list case recursively, exactly like the PyTorch module.
    """
    if isinstance(x, list):
        return [scalar_multiply_forward(xi, alpha, force_pallas=force_pallas) for xi in x]

    x = jnp.asarray(x)
    n = x.size
    nbytes = n * jnp.dtype(x.dtype).itemsize

    def _fused_fallback():
        # XLA fuses this into neighbors; matches the kernel's f32 compute.
        return (jnp.float32(alpha) * x.astype(jnp.float32)).astype(x.dtype)

    if n == 0:
        return _fused_fallback()

    if not force_pallas and nbytes < _MIN_PALLAS_BYTES:
        # Small tensors: pallas_call launch/pipeline overhead dwarfs the work.
        return _fused_fallback()

    # Choose the widest lane width that divides n so the reshape is a free view
    # (no pad/concat/slice HBM round-trips).
    W = next((w for w in _LANE_CANDIDATES if n % w == 0), None)
    if W is None:
        # n not a multiple of 128: no pad-free lane-dense slab; fused XLA op is
        # both correct and optimal for this mem-bound scalar multiply.
        return _fused_fallback()

    x2d = x.reshape(n // W, W)
    alpha_arr = jnp.asarray([alpha], dtype=jnp.float32)
    y2d = _scalar_multiply_2d(x2d, alpha_arr)
    return y2d.reshape(x.shape)


if __name__ == "__main__":
    key = jax.random.PRNGKey(0)
    alpha = 2.5  # ScalarMultiply(2.5); module has no learnable params (length=0)

    # NCHW input, consistent with conv-style usage in modula.
    x = jax.random.normal(key, (2, 4, 16, 16), dtype=jnp.float32)

    # Force the Pallas path so the kernel actually executes on this small input
    # (the default policy would route it to the fused XLA fast path).
    y = scalar_multiply_forward(x, alpha, force_pallas=True)
    y = jax.block_until_ready(y)
    ref = alpha * x
    assert jnp.allclose(y, ref, atol=1e-6), "mismatch vs reference (pallas path)"

    # Default policy (small-tensor fast path) + the list branch of forward().
    xs = [x, x * 0.5]
    ys = scalar_multiply_forward(xs, alpha)
    ys = [jax.block_until_ready(yi) for yi in ys]
    assert jnp.allclose(ys[0], alpha * xs[0], atol=1e-6)
    assert jnp.allclose(ys[1], alpha * xs[1], atol=1e-6)

    print("KERNEL_OK")
</pallas_src>

<mosaic_0001>
module attributes {stable_mosaic.version = 11 : i64} {
  func.func @_scalar_multiply_kernel(%arg0: i32, %arg1: memref<1xf32, #tpu.memory_space<smem>>, %arg2: memref<1x2048xf32, #tpu.memory_space<vmem>>, %arg3: memref<1x2048xf32, #tpu.memory_space<vmem>>) attributes {dimension_semantics = [#tpu.dimension_semantics<parallel>], iteration_bounds = array<i64: 1>, scalar_prefetch = 0 : i64, scratch_operands = 0 : i64, tpu.core_type = #tpu.core_type<tc>, window_params = [{transform_indices = @transform_0, window_bounds = array<i64: 1>}, {transform_indices = @transform_1, window_bounds = array<i64: 1, 2048>}, {transform_indices = @transform_2, window_bounds = array<i64: 1, 2048>}]} {
    %c0 = arith.constant 0 : index
    %0 = memref.load %arg1[%c0] : memref<1xf32, #tpu.memory_space<smem>>
    %c0_0 = arith.constant 0 : index
    %c0_1 = arith.constant 0 : index
    %1 = vector.load %arg2[%c0_0, %c0_1] : memref<1x2048xf32, #tpu.memory_space<vmem>>, vector<1x2048xf32>
    %2 = vector.broadcast %0 : f32 to vector<1x2048xf32>
    %3 = arith.mulf %2, %1 : vector<1x2048xf32>
    %c0_2 = arith.constant 0 : index
    %c0_3 = arith.constant 0 : index
    %4 = vector.load %arg3[%c0_2, %c0_3] : memref<1x2048xf32, #tpu.memory_space<vmem>>, vector<1x2048xf32>
    tpu.vector_store %arg3[%c0_2, %c0_3], %3 {strides = array<i32>} : memref<1x2048xf32, #tpu.memory_space<vmem>>, vector<1x2048xf32>,
    return
  }
  func.func @transform_0(%arg0: i32) -> i32 {
    %c0_i32 = arith.constant 0 : i32
    %c0_i32_0 = arith.constant 0 : i32
    return %c0_i32 : i32
  }
  func.func @transform_1(%arg0: i32) -> (i32, i32) {
    %c0_i32 = arith.constant 0 : i32
    %c0_i32_0 = arith.constant 0 : i32
    return %arg0, %c0_i32 : i32, i32
  }
  func.func @transform_2(%arg0: i32) -> (i32, i32) {
    %c0_i32 = arith.constant 0 : i32
    %c0_i32_0 = arith.constant 0 : i32
    return %arg0, %c0_i32 : i32, i32
  }
}

</mosaic_0001>

<llo_original>
// kernel: tpu_custom_call.1
$region0: #{tpu_custom_call.1}
  #allocation0 [shape = 'u32[]', space=smem, size = 0x4, offset = 0x4, fixed_abs, tag = 'smem constant byte address 0x4 - core index']
  #allocation1 [shape = 'u32[144,128]{1,0:T(1,128)}', space=vmem, size = 0x12000, scoped, tag = 'internal scratch']
  #allocation2 [shape = 'f32[1]{0:T(128)S(6)}', space=smem, size = 0x200, scoped, tag = 'scoped memory for tpu_custom_call.1']
  %s0 = inlined_call_operand.<no memory space> [shape: f32[1], index: 0, kind: input, shape index: {}]
  %s1 = inlined_call_operand.hbm [shape: f32[1,2048], index: 1, kind: input, shape index: {}]
  %s2 = inlined_call_operand.hbm [shape: f32[1,2048], index: 2, kind: output, shape index: {}]
  %s3 = sld [smem:[#allocation0]]
  $region22: #{tpu_custom_call.1} parent=0
    _
  %s5 = ssub.s32 1, %s3
  %s6 = scalar_select 0, %s5, %s3
  %7 = sst [smem:[#allocation2]] %s0
  $region1: #{tpu_custom_call.1} parent=0
    #allocation3 [shape = 'u8[8192]{0}', space=vmem, size = 0x2000, scoped, tag = 'input window, operand 1, single buffered']
    #allocation4 [shape = 's32[1]{0}', space=sflag, size = 0x4, scoped, tag = 'scoped memory for tpu_custom_call.1']
    #allocation5 [shape = 's32[1]{0}', space=sflag, size = 0x4, scoped, tag = 'scoped memory for tpu_custom_call.1']
    #allocation6 [shape = 'u8[8192]{0}', space=vmem, size = 0x2000, scoped, tag = 'output window, operand 0, single buffered']
    %8 = vsyncpa [#allocation4], 0
    %9 = vsyncpa [#allocation5], 0
    // Predicated region
    $region2: #{tpu_custom_call.1} parent=1 // pred_check
      _
    $region3: #{tpu_custom_call.1} parent=1 // pred_check_branch
      %11 = sbr.rel (0) target = $region5
    $region4: #{tpu_custom_call.1} parent=1 // pred_region
      _
    $region5: #{tpu_custom_call.1} parent=1 // pred_fallthru
      _
    // Predicated region
    $region6: #{tpu_custom_call.1} parent=1 // pred_check
      _
    $region7: #{tpu_custom_call.1} parent=1 // pred_check_branch
      %13 = sbr.rel (0) target = $region9
    $region8: #{tpu_custom_call.1} parent=1 // pred_region
      %s15 = ssub.s32 256, 256
      %16 = vsyncadd [#allocation4], %s15
      %s18 = sshll.u32 [#allocation3], 4
      %s19 = int_to_ptr.vmem [resolvable:$true] %s18
      %21 = dma.hbm_to_vmem [thread:$0]  %s1, 256, %s19, [#allocation4]
    $region9: #{tpu_custom_call.1} parent=1 // pred_fallthru
      _
    // Predicated region
    $region10: #{tpu_custom_call.1} parent=1 // pred_check
      _
    $region11: #{tpu_custom_call.1} parent=1 // pred_check_branch
      %23 = sbr.rel (0) target = $region13
    $region12: #{tpu_custom_call.1} parent=1 // pred_region
      %24 = dma.done [#allocation4], 256
    $region13: #{tpu_custom_call.1} parent=1 // pred_fallthru
      _
    %s25 = sld [smem:[#allocation2]]
    %v26 = vld [vmem:[#allocation3] sm:$0xff]
    %v27 = vld [vmem:[#allocation3 + $0x8] sm:$0xff]
    %v28 = vstv %s25
    %v29 = vmul.f32 %v28, %v26
    %v30 = vmul.f32 %v28, %v27
    %31 = vst [vmem:[#allocation6] sm:$0xff] %v29
    %32 = vst [vmem:[#allocation6 + $0x8] sm:$0xff] %v30
    // Predicated region
    $region14: #{tpu_custom_call.1} parent=1 // pred_check
      _
    $region15: #{tpu_custom_call.1} parent=1 // pred_check_branch
      %34 = sbr.rel (0) target = $region17
    $region16: #{tpu_custom_call.1} parent=1 // pred_region
      %s36 = ssub.s32 256, 256
      %37 = vsyncadd [#allocation5], %s36
      %s39 = sshll.u32 [#allocation6], 4
      %s40 = int_to_ptr.vmem [resolvable:$true] %s39
      %42 = dma.vmem_to_hbm [thread:$0]  %s40, 256, %s2, [#allocation5]
    $region17: #{tpu_custom_call.1} parent=1 // pred_fallthru
      _
    // Predicated region
    $region18: #{tpu_custom_call.1} parent=1 // pred_check
      _
    $region19: #{tpu_custom_call.1} parent=1 // pred_check_branch
      %44 = sbr.rel (0) target = $region21
    $region20: #{tpu_custom_call.1} parent=1 // pred_region
      %45 = dma.done [#allocation5], 256
    $region21: #{tpu_custom_call.1} parent=1 // pred_fallthru
      _
    %46 = vsyncpa [#allocation4], 1
    %47 = vsyncpa [#allocation5], 1

</llo_original>
